<compile_context>
chip_gen: v5e
topology: v5e:2x2
jax: 0.10.0
libtpu: 0.0.40
codegen_flags: <defaults>
</compile_context>

<pallas_src>
import functools
import math

import jax
import jax.numpy as jnp
from jax.experimental import pallas as pl
from jax.experimental.pallas import tpu as pltpu

EPS = 1e-4                       # torch.clamp(min=0.0001, max=1-0.0001)
_LOG_EPS = math.log(EPS)
_LOG_1MEPS = math.log(1.0 - EPS)


def _round_up(x, m):
    return (x + m - 1) // m * m


def _cdiv(a, b):
    return -(-a // b)


def _tile_params():
    """(max tile rows, vmem_limit_bytes); generation-aware, safe fallback."""
    max_rows, vmem_limit = 512, 32 * 1024 * 1024            # safe on v7x (64 MiB)
    try:
        info = pltpu.get_tpu_info()
        if int(getattr(info, "vmem_capacity_bytes", 0)) >= 100 * 1024 * 1024:
            max_rows, vmem_limit = 1024, 64 * 1024 * 1024    # v5e / v6e (128 MiB)
    except Exception:
        pass
    return max_rows, vmem_limit


def _plan(total, max_rows):
    """Lane-dense (rows, lane) tiling plan for a flat array of `total` elems."""
    lane = None
    for cand in (1024, 512, 256, 128):
        if total % cand == 0:
            lane, pad = cand, 0
            break
    if lane is None:
        lane = 128
        pad = (-total) % 128
    rows = (total + pad) // lane
    if rows <= max_rows:
        tile_r, grid = rows, 1                 # single full-dim block (always legal)
    else:
        n_tiles = _cdiv(rows, max_rows)
        tile_r = _round_up(_cdiv(rows, n_tiles), 8)
        grid = _cdiv(rows, tile_r)
    need_mask = (pad > 0) or (rows % tile_r != 0)
    out_rows = 8 if tile_r % 8 == 0 else 1
    return lane, pad, tile_r, grid, need_mask, out_rows


def _as_2d(x, lane, pad):
    if pad:
        # TODO(synk): rare fallback copy, only when numel is not a multiple of 128.
        flat = jnp.pad(x.reshape(-1), (0, pad))
        return flat.reshape(-1, lane)
    return x.reshape(-1, lane)                 # free reshape, native dtype, no copy


# ---------------------------------------------------------------------------
# Focal loss (CornerNet "_neg_loss") — tiled streaming reduction
# ---------------------------------------------------------------------------
def _focal_kernel(total, tile_r, need_mask,
                  pred_ref, gt_ref, pos_ref, neg_ref, npos_ref):
    def psum(v):
        if tile_r % 8 == 0:
            return v.reshape(tile_r // 8, 8, v.shape[-1]).sum(axis=0)
        return jnp.sum(v, axis=0, keepdims=True)

    def run(valid):
        x = pred_ref[...].astype(jnp.float32)
        gt = gt_ref[...].astype(jnp.float32)
        p = jnp.clip(jax.nn.sigmoid(x), EPS, 1.0 - EPS)      # _sigmoid()
        omp = 1.0 - p
        log_omp = jnp.log(omp)
        # log(clip(sigmoid(x))) via the log-sigmoid identity; the outer clip
        # makes it exactly match the clamped reference (1 EUP log instead of 2).
        log_p = jnp.clip(x + log_omp, _LOG_EPS, _LOG_1MEPS)
        q = 1.0 - gt
        q2 = q * q
        neg_w = q2 * q2                                      # (1-gt)**4 via muls
        pos_c = gt == 1.0
        neg_c = gt < 1.0
        if valid is not None:
            pos_c = jnp.logical_and(pos_c, valid)
            neg_c = jnp.logical_and(neg_c, valid)
        pos_l = jnp.where(pos_c, log_p * (omp * omp), 0.0)
        neg_l = jnp.where(neg_c, log_omp * (p * p) * neg_w, 0.0)
        npos = jnp.where(pos_c, 1.0, 0.0)
        pos_ref[...] = psum(pos_l)
        neg_ref[...] = psum(neg_l)
        npos_ref[...] = psum(npos)

    if not need_mask:
        run(None)
    else:
        i = pl.program_id(0)
        last = pl.num_programs(0) - 1

        @pl.when(i < last)
        def _interior():                       # full tiles: no validity-mask cost
            run(None)

        @pl.when(i == last)
        def _tail():                           # ragged tail: exact element mask
            tr, lane = pred_ref.shape
            r = jax.lax.broadcasted_iota(jnp.int32, (tr, lane), 0)
            c = jax.lax.broadcasted_iota(jnp.int32, (tr, lane), 1)
            valid = ((i * tr + r) * lane + c) < total
            run(valid)


# ---------------------------------------------------------------------------
# Mask (dice-style) loss — tiled streaming reduction
# ---------------------------------------------------------------------------
def _mask_kernel(total, tile_r, need_mask,
                 pred_ref, tgt_ref, pt_ref, pp_ref, tt_ref):
    def psum(v):
        if tile_r % 8 == 0:
            return v.reshape(tile_r // 8, 8, v.shape[-1]).sum(axis=0)
        return jnp.sum(v, axis=0, keepdims=True)

    def run(valid):
        x = pred_ref[...].astype(jnp.float32)
        t = tgt_ref[...].astype(jnp.float32)
        p = jnp.clip(jax.nn.sigmoid(x), EPS, 1.0 - EPS)
        if valid is not None:
            p = jnp.where(valid, p, 0.0)
            t = jnp.where(valid, t, 0.0)
        pt_ref[...] = psum(p * t)
        pp_ref[...] = psum(p * p)
        tt_ref[...] = psum(t * t)

    if not need_mask:
        run(None)
    else:
        i = pl.program_id(0)
        last = pl.num_programs(0) - 1

        @pl.when(i < last)
        def _interior():
            run(None)

        @pl.when(i == last)
        def _tail():
            tr, lane = pred_ref.shape
            r = jax.lax.broadcasted_iota(jnp.int32, (tr, lane), 0)
            c = jax.lax.broadcasted_iota(jnp.int32, (tr, lane), 1)
            valid = ((i * tr + r) * lane + c) < total
            run(valid)


def _streaming_call(kernel_fn, a, b, n_outs):
    total = int(a.size)
    max_rows, vmem_limit = _tile_params()
    lane, pad, tile_r, grid, need_mask, out_rows = _plan(total, max_rows)
    a2 = _as_2d(a, lane, pad)
    b2 = _as_2d(b, lane, pad)
    out_sd = jax.ShapeDtypeStruct((grid * out_rows, lane), jnp.float32)
    return pl.pallas_call(
        functools.partial(kernel_fn, total, tile_r, need_mask),
        grid=(grid,),
        in_specs=[pl.BlockSpec((tile_r, lane), lambda i: (i, 0))] * 2,
        out_specs=(pl.BlockSpec((out_rows, lane), lambda i: (i, 0)),) * n_outs,
        out_shape=(out_sd,) * n_outs,
        compiler_params=pltpu.CompilerParams(
            dimension_semantics=("parallel",),
            vmem_limit_bytes=vmem_limit),
    )(a2, b2)


def focal_loss(pred_hm, gt_hm):
    pos_p, neg_p, npos_p = _streaming_call(_focal_kernel, pred_hm, gt_hm, 3)
    pos_s = jnp.sum(pos_p)
    neg_s = jnp.sum(neg_p)
    num_pos = jnp.sum(npos_p)
    return jnp.where(num_pos == 0.0, -neg_s,
                     -(pos_s + neg_s) / jnp.maximum(num_pos, 1.0))


def mask_loss(pred_mask, target_mask):
    pt_p, pp_p, tt_p = _streaming_call(_mask_kernel, pred_mask, target_mask, 3)
    a = 2.0 * jnp.sum(pt_p)
    b = jnp.sum(pp_p) + jnp.sum(tt_p)
    return 1.0 - a / b


# ---------------------------------------------------------------------------
# Fused RegL1 (SMEM scalar gather + masked smooth-L1) for heads sharing ind
# ---------------------------------------------------------------------------
def _regl1_kernel(head_channels, hw, ind_ref, mask_ref, *rest):
    n = len(head_channels)
    feat_refs = rest[0:2 * n:2]                # (C_h, R, 128) per head
    tgt_refs = rest[1:2 * n:2]                 # (C_h, K) per head
    out_refs = rest[2 * n:3 * n]               # (C_h, K) per head
    b = pl.program_id(0)
    k_len = mask_ref.shape[-1]

    lane_iota = jax.lax.broadcasted_iota(jnp.int32, (1, 1, 128), 2)

    # Scalar-indexed gather: dynamic *sublane* slice + lane one-hot reduce.
    # Fully unrolled over K (compile-time constant) for LLO visibility.
    for k in range(k_len):
        idx = jnp.clip(ind_ref[b, k], 0, hw - 1)         # guard garbage indices
        row = idx // 128
        col = idx % 128
        sel = lane_iota == col
        for feat_ref, out_ref in zip(feat_refs, out_refs):
            slab = feat_ref[:, pl.ds(row, 1), :].astype(jnp.float32)   # (C,1,128)
            g = jnp.sum(jnp.where(sel, slab, 0.0), axis=2)             # (C,1)
            out_ref[:, k:k + 1] = g

    m = mask_ref[...].astype(jnp.float32)                # (1, K) 0/1 mask
    for out_ref, tgt_ref in zip(out_refs, tgt_refs):
        d = (out_ref[...] - tgt_ref[...].astype(jnp.float32)) * m
        ad = jnp.abs(d)
        out_ref[...] = jnp.where(ad < 1.0, 0.5 * d * d, ad - 0.5)      # beta=1


def regl1_losses(preds, targets, reg_mask, ind):
    """Fused RegL1 for heads sharing ind/reg_mask; returns one loss per head."""
    B, _, H, W = preds[0].shape
    HW = H * W
    K = int(targets[0].shape[1])
    cs = [int(p.shape[1]) for p in preds]

    hw_pad = _round_up(HW, 128)
    R = hw_pad // 128
    feats = []
    for p in preds:
        f = p.reshape(B, p.shape[1], HW)                 # free NCHW -> (B,C,HW)
        if hw_pad != HW:
            # TODO(synk): rare copy, only when H*W is not a multiple of 128.
            f = jnp.pad(f, ((0, 0), (0, 0), (0, hw_pad - HW)))
        feats.append(f.reshape(B, p.shape[1], R, 128))   # lane-dense view

    tgts = [jnp.transpose(t, (0, 2, 1)).astype(jnp.float32) for t in targets]
    mask3 = reg_mask.astype(jnp.float32).reshape(B, 1, K)
    ind32 = ind.astype(jnp.int32)

    _, vmem_limit = _tile_params()

    in_specs = [pl.BlockSpec((None, 1, K), lambda b, ind_r: (b, 0, 0))]
    inputs = [mask3]
    for f, t, c in zip(feats, tgts, cs):
        in_specs.append(
            pl.BlockSpec((None, c, R, 128), lambda b, ind_r: (b, 0, 0, 0)))
        in_specs.append(pl.BlockSpec((None, c, K), lambda b, ind_r: (b, 0, 0)))
        inputs.extend([f, t])

    grid_spec = pltpu.PrefetchScalarGridSpec(
        num_scalar_prefetch=1,                           # ind -> SMEM
        grid=(B,),
        in_specs=in_specs,
        out_specs=tuple(
            pl.BlockSpec((None, c, K), lambda b, ind_r: (b, 0, 0)) for c in cs),
    )
    outs = pl.pallas_call(
        functools.partial(_regl1_kernel, tuple(cs), HW),
        grid_spec=grid_spec,
        out_shape=tuple(jax.ShapeDtypeStruct((B, c, K), jnp.float32) for c in cs),
        compiler_params=pltpu.CompilerParams(
            dimension_semantics=("parallel",),           # per-batch outputs
            vmem_limit_bytes=vmem_limit),
    )(ind32, *inputs)
    if not isinstance(outs, (list, tuple)):
        outs = (outs,)

    # mask.sum() after expand_as(pred) == C_head * sum(reg_mask)  (exact)
    msum = jnp.sum(reg_mask.astype(jnp.float32))
    return [jnp.sum(o) / (c * msum + 1e-4) for o, c in zip(outs, cs)]


# ---------------------------------------------------------------------------
# CtdetLoss
# ---------------------------------------------------------------------------
class CtdetLoss:
    def __init__(self, loss_weight):
        self.loss_weight = loss_weight

    def __call__(self, pred_tensor, target_tensor):
        hm_weight = self.loss_weight['hm_weight']
        wh_weight = self.loss_weight['wh_weight']
        reg_weight = self.loss_weight['reg_weight']
        mask_weight = self.loss_weight['mask_weight']

        m_loss = mask_loss(pred_tensor['mask'], target_tensor['mask'])
        hm_loss = focal_loss(pred_tensor['hm'], target_tensor['hm'])

        wh_loss = jnp.float32(0.0)
        off_loss = jnp.float32(0.0)
        heads = []
        if wh_weight > 0:
            heads.append(('wh', pred_tensor['wh'], target_tensor['wh']))
        if reg_weight > 0:
            heads.append(('reg', pred_tensor['reg'], target_tensor['reg']))
        if heads:
            losses = regl1_losses([p for _, p, _ in heads],
                                  [t for _, _, t in heads],
                                  target_tensor['reg_mask'],
                                  target_tensor['ind'])
            for (name, _, _), v in zip(heads, losses):
                if name == 'wh':
                    wh_loss = v
                else:
                    off_loss = v

        return (hm_weight * hm_loss, wh_weight * wh_loss,
                reg_weight * off_loss, mask_weight * m_loss)


# ---------------------------------------------------------------------------
# Pure-JAX reference (mirrors the PyTorch module) for validation
# ---------------------------------------------------------------------------
def _ref_losses(pred_tensor, target_tensor, loss_weight):
    def sig(x):
        return jnp.clip(jax.nn.sigmoid(x), EPS, 1.0 - EPS)

    p = sig(pred_tensor['mask'])
    t = target_tensor['mask']
    a = 2.0 * jnp.sum(p * t)
    b = jnp.sum(p * p) + jnp.sum(t * t)
    m_loss = 1.0 - a / b

    p = sig(pred_tensor['hm'])
    gt = target_tensor['hm']
    pos_inds = (gt == 1.0).astype(jnp.float32)
    neg_inds = (gt < 1.0).astype(jnp.float32)
    neg_w = (1.0 - gt) ** 4
    pos_l = jnp.sum(jnp.log(p) * (1.0 - p) ** 2 * pos_inds)
    neg_l = jnp.sum(jnp.log(1.0 - p) * p * p * neg_w * neg_inds)
    num_pos = jnp.sum(pos_inds)
    hm_loss = jnp.where(num_pos == 0.0, -neg_l,
                        -(pos_l + neg_l) / jnp.maximum(num_pos, 1.0))

    def regl1(pred, mask, ind, target):
        B, C, H, W = pred.shape
        feat = jnp.transpose(pred, (0, 2, 3, 1)).reshape(B, H * W, C)
        idx = jnp.broadcast_to(ind[:, :, None].astype(jnp.int32), target.shape)
        g = jnp.take_along_axis(feat, idx, axis=1)
        m = jnp.broadcast_to(mask[:, :, None].astype(jnp.float32), g.shape)
        d = g * m - target * m
        ad = jnp.abs(d)
        sl1 = jnp.where(ad < 1.0, 0.5 * d * d, ad - 0.5)
        return jnp.sum(sl1) / (jnp.sum(m) + 1e-4)

    wh_loss = regl1(pred_tensor['wh'], target_tensor['reg_mask'],
                    target_tensor['ind'], target_tensor['wh'])
    off_loss = regl1(pred_tensor['reg'], target_tensor['reg_mask'],
                     target_tensor['ind'], target_tensor['reg'])

    return (loss_weight['hm_weight'] * hm_loss,
            loss_weight['wh_weight'] * wh_loss,
            loss_weight['reg_weight'] * off_loss,
            loss_weight['mask_weight'] * m_loss)


# ---------------------------------------------------------------------------
# Example run
# ---------------------------------------------------------------------------
if __name__ == "__main__":
    B, C_HM, H, W, K = 2, 4, 16, 16, 8

    key = jax.random.PRNGKey(0)
    k = jax.random.split(key, 10)

    pred_tensor = {
        'hm':   jax.random.normal(k[0], (B, C_HM, H, W), jnp.float32),
        'mask': jax.random.normal(k[1], (B, 1, H, W), jnp.float32),
        'wh':   jax.random.normal(k[2], (B, 2, H, W), jnp.float32),
        'reg':  jax.random.normal(k[3], (B, 2, H, W), jnp.float32),
    }

    gt_hm = jax.random.uniform(k[4], (B, C_HM, H, W), jnp.float32, 0.0, 0.9)
    gt_hm = gt_hm.at[0, 0, 4, 4].set(1.0)
    gt_hm = gt_hm.at[0, 1, 8, 9].set(1.0)
    gt_hm = gt_hm.at[1, 2, 3, 12].set(1.0)

    reg_mask = jnp.zeros((B, K), jnp.float32).at[:, :5].set(1.0)

    target_tensor = {
        'hm':       gt_hm,
        'mask':     jax.random.uniform(k[5], (B, 1, H, W), jnp.float32),
        'reg_mask': reg_mask,
        'ind':      jax.random.randint(k[6], (B, K), 0, H * W, jnp.int32),
        'wh':       jax.random.uniform(k[7], (B, K, 2), jnp.float32, 0.0, 8.0),
        'reg':      jax.random.uniform(k[8], (B, K, 2), jnp.float32, 0.0, 1.0),
    }

    loss_weight = {'hm_weight': 1.0, 'wh_weight': 0.1,
                   'reg_weight': 1.0, 'mask_weight': 1.0}

    crit = CtdetLoss(loss_weight)
    out = crit(pred_tensor, target_tensor)
    out = jax.block_until_ready(out)

    ref = jax.block_until_ready(_ref_losses(pred_tensor, target_tensor,
                                            loss_weight))
    for o, r in zip(out, ref):
        assert jnp.allclose(o, r, rtol=2e-3, atol=2e-4), (o, r)

    print("KERNEL_OK")
</pallas_src>

<mosaic_0001>
module attributes {stable_mosaic.version = 11 : i64} {
  func.func @_mask_kernel(%arg0: i32, %arg1: memref<1x512xf32, #tpu.memory_space<vmem>>, %arg2: memref<1x512xf32, #tpu.memory_space<vmem>>, %arg3: memref<1x512xf32, #tpu.memory_space<vmem>>, %arg4: memref<1x512xf32, #tpu.memory_space<vmem>>, %arg5: memref<1x512xf32, #tpu.memory_space<vmem>>) attributes {dimension_semantics = [#tpu.dimension_semantics<parallel>], iteration_bounds = array<i64: 1>, scalar_prefetch = 0 : i64, scratch_operands = 0 : i64, tpu.core_type = #tpu.core_type<tc>, window_params = [{transform_indices = @transform_0, window_bounds = array<i64: 1, 512>}, {transform_indices = @transform_1, window_bounds = array<i64: 1, 512>}, {transform_indices = @transform_2, window_bounds = array<i64: 1, 512>}, {transform_indices = @transform_3, window_bounds = array<i64: 1, 512>}, {transform_indices = @transform_4, window_bounds = array<i64: 1, 512>}]} {
    %c0 = arith.constant 0 : index
    %c0_0 = arith.constant 0 : index
    %0 = vector.load %arg1[%c0, %c0_0] : memref<1x512xf32, #tpu.memory_space<vmem>>, vector<1x512xf32>
    %c0_1 = arith.constant 0 : index
    %c0_2 = arith.constant 0 : index
    %1 = vector.load %arg2[%c0_1, %c0_2] : memref<1x512xf32, #tpu.memory_space<vmem>>, vector<1x512xf32>
    %2 = arith.negf %0 : vector<1x512xf32>
    %3 = math.exp %2 : vector<1x512xf32>
    %cst = arith.constant 1.000000e+00 : f32
    %4 = vector.broadcast %cst : f32 to vector<1x512xf32>
    %5 = arith.addf %4, %3 : vector<1x512xf32>
    %6 = arith.divf %4, %5 : vector<1x512xf32>
    %cst_3 = arith.constant 9.99999974E-5 : f32
    %cst_4 = arith.constant 0.999899983 : f32
    %7 = vector.broadcast %cst_3 : f32 to vector<1x512xf32>
    %8 = arith.maximumf %7, %6 : vector<1x512xf32>
    %9 = vector.broadcast %cst_4 : f32 to vector<1x512xf32>
    %10 = arith.minimumf %9, %8 : vector<1x512xf32>
    %11 = arith.mulf %10, %1 : vector<1x512xf32>
    %cst_5 = arith.constant dense<0.000000e+00> : vector<512xf32>
    %12 = vector.multi_reduction <add>, %11, %cst_5 [0] : vector<1x512xf32> to vector<512xf32>
    %13 = vector.shape_cast %12 : vector<512xf32> to vector<1x512xf32>
    %c0_6 = arith.constant 0 : index
    %c0_7 = arith.constant 0 : index
    %14 = vector.load %arg3[%c0_6, %c0_7] : memref<1x512xf32, #tpu.memory_space<vmem>>, vector<1x512xf32>
    tpu.vector_store %arg3[%c0_6, %c0_7], %13 {strides = array<i32>} : memref<1x512xf32, #tpu.memory_space<vmem>>, vector<1x512xf32>,
    %15 = arith.mulf %10, %10 : vector<1x512xf32>
    %cst_8 = arith.constant dense<0.000000e+00> : vector<512xf32>
    %16 = vector.multi_reduction <add>, %15, %cst_8 [0] : vector<1x512xf32> to vector<512xf32>
    %17 = vector.shape_cast %16 : vector<512xf32> to vector<1x512xf32>
    %c0_9 = arith.constant 0 : index
    %c0_10 = arith.constant 0 : index
    %18 = vector.load %arg4[%c0_9, %c0_10] : memref<1x512xf32, #tpu.memory_space<vmem>>, vector<1x512xf32>
    tpu.vector_store %arg4[%c0_9, %c0_10], %17 {strides = array<i32>} : memref<1x512xf32, #tpu.memory_space<vmem>>, vector<1x512xf32>,
    %19 = arith.mulf %1, %1 : vector<1x512xf32>
    %cst_11 = arith.constant dense<0.000000e+00> : vector<512xf32>
    %20 = vector.multi_reduction <add>, %19, %cst_11 [0] : vector<1x512xf32> to vector<512xf32>
    %21 = vector.shape_cast %20 : vector<512xf32> to vector<1x512xf32>
    %c0_12 = arith.constant 0 : index
    %c0_13 = arith.constant 0 : index
    %22 = vector.load %arg5[%c0_12, %c0_13] : memref<1x512xf32, #tpu.memory_space<vmem>>, vector<1x512xf32>
    tpu.vector_store %arg5[%c0_12, %c0_13], %21 {strides = array<i32>} : memref<1x512xf32, #tpu.memory_space<vmem>>, vector<1x512xf32>,
    return
  }
  func.func @transform_0(%arg0: i32) -> (i32, i32) {
    %c0_i32 = arith.constant 0 : i32
    %c0_i32_0 = arith.constant 0 : i32
    return %arg0, %c0_i32 : i32, i32
  }
  func.func @transform_1(%arg0: i32) -> (i32, i32) {
    %c0_i32 = arith.constant 0 : i32
    %c0_i32_0 = arith.constant 0 : i32
    return %arg0, %c0_i32 : i32, i32
  }
  func.func @transform_2(%arg0: i32) -> (i32, i32) {
    %c0_i32 = arith.constant 0 : i32
    %c0_i32_0 = arith.constant 0 : i32
    return %arg0, %c0_i32 : i32, i32
  }
  func.func @transform_3(%arg0: i32) -> (i32, i32) {
    %c0_i32 = arith.constant 0 : i32
    %c0_i32_0 = arith.constant 0 : i32
    return %arg0, %c0_i32 : i32, i32
  }
  func.func @transform_4(%arg0: i32) -> (i32, i32) {
    %c0_i32 = arith.constant 0 : i32
    %c0_i32_0 = arith.constant 0 : i32
    return %arg0, %c0_i32 : i32, i32
  }
}

</mosaic_0001>

<llo_original>
// kernel: tpu_custom_call.1
$region0: #{tpu_custom_call.1}
  #allocation0 [shape = 'u32[]', space=smem, size = 0x4, offset = 0x4, fixed_abs, tag = 'smem constant byte address 0x4 - core index']
  #allocation1 [shape = 'u32[72,128]{1,0:T(1,128)}', space=vmem, size = 0x9000, scoped, tag = 'internal scratch']
  %s0 = inlined_call_operand.hbm [shape: f32[1,512], index: 0, kind: input, shape index: {}]
  %s1 = inlined_call_operand.hbm [shape: f32[1,512], index: 1, kind: input, shape index: {}]
  %s2 = inlined_call_operand.hbm [shape: f32[1,512], index: 2, kind: output, shape index: {0}]
  %s3 = inlined_call_operand.hbm [shape: f32[1,512], index: 3, kind: output, shape index: {1}]
  %s4 = inlined_call_operand.hbm [shape: f32[1,512], index: 4, kind: output, shape index: {2}]
  %5 = xla_tuple %s2, %s3, %s4
  %s6 = sld [smem:[#allocation0]]
  $region42: #{tpu_custom_call.1} parent=0
    _
  %s8 = ssub.s32 1, %s6
  %s9 = scalar_select 0, %s8, %s6
  $region1: #{tpu_custom_call.1} parent=0
    #allocation2 [shape = 'u8[2048]{0}', space=vmem, size = 0x800, scoped, tag = 'input window, operand 0, single buffered']
    #allocation3 [shape = 's32[1]{0}', space=sflag, size = 0x4, scoped, tag = 'scoped memory for tpu_custom_call.1']
    #allocation4 [shape = 's32[1]{0}', space=sflag, size = 0x4, scoped, tag = 'scoped memory for tpu_custom_call.1']
    #allocation5 [shape = 'u8[2048]{0}', space=vmem, size = 0x800, scoped, tag = 'input window, operand 1, single buffered']
    #allocation6 [shape = 's32[1]{0}', space=sflag, size = 0x4, scoped, tag = 'scoped memory for tpu_custom_call.1']
    #allocation7 [shape = 'u8[2048]{0}', space=vmem, size = 0x800, scoped, tag = 'output window, operand 0, single buffered']
    #allocation8 [shape = 'u8[2048]{0}', space=vmem, size = 0x800, scoped, tag = 'output window, operand 1, single buffered']
    #allocation9 [shape = 's32[1]{0}', space=sflag, size = 0x4, scoped, tag = 'scoped memory for tpu_custom_call.1']
    #allocation10 [shape = 'u8[2048]{0}', space=vmem, size = 0x800, scoped, tag = 'output window, operand 2, single buffered']
    %10 = vsyncpa [#allocation3], 0
    %11 = vsyncpa [#allocation6], 0
    %12 = vsyncpa [#allocation4], 0
    %13 = vsyncpa [#allocation9], 0
    // Predicated region
    $region2: #{tpu_custom_call.1} parent=1 // pred_check
      _
    $region3: #{tpu_custom_call.1} parent=1 // pred_check_branch
      %15 = sbr.rel (0) target = $region5
    $region4: #{tpu_custom_call.1} parent=1 // pred_region
      %17 = vsyncadd [#allocation3], 0
      %s19 = sshll.u32 %s0, 4
      %s20 = int_to_ptr.hbm [resolvable:$true] %s19
      %s21 = sshll.u32 [#allocation2], 4
      %s22 = int_to_ptr.vmem [resolvable:$true] %s21
      %24 = dma.hbm_to_vmem [thread:$0]  %s20, 64, %s22, [#allocation3]
    $region5: #{tpu_custom_call.1} parent=1 // pred_fallthru
      _
    // Predicated region
    $region6: #{tpu_custom_call.1} parent=1 // pred_check
      _
    $region7: #{tpu_custom_call.1} parent=1 // pred_check_branch
      %26 = sbr.rel (0) target = $region9
    $region8: #{tpu_custom_call.1} parent=1 // pred_region
      %28 = vsyncadd [#allocation6], 0
      %s30 = sshll.u32 %s1, 4
      %s31 = int_to_ptr.hbm [resolvable:$true] %s30
      %s32 = sshll.u32 [#allocation5], 4
      %s33 = int_to_ptr.vmem [resolvable:$true] %s32
      %35 = dma.hbm_to_vmem [thread:$0]  %s31, 64, %s33, [#allocation6]
    $region9: #{tpu_custom_call.1} parent=1 // pred_fallthru
      _
    // Predicated region
    $region10: #{tpu_custom_call.1} parent=1 // pred_check
      _
    $region11: #{tpu_custom_call.1} parent=1 // pred_check_branch
      %37 = sbr.rel (0) target = $region13
    $region12: #{tpu_custom_call.1} parent=1 // pred_region
      %39 = dma.done [#allocation3], 64
    $region13: #{tpu_custom_call.1} parent=1 // pred_fallthru
      _
    // Predicated region
    $region14: #{tpu_custom_call.1} parent=1 // pred_check
      _
    $region15: #{tpu_custom_call.1} parent=1 // pred_check_branch
      %41 = sbr.rel (0) target = $region17
    $region16: #{tpu_custom_call.1} parent=1 // pred_region
      %43 = dma.done [#allocation6], 64
    $region17: #{tpu_custom_call.1} parent=1 // pred_fallthru
      _
    %v44 = vld [vmem:[#allocation2] sm:$0xf]
    %v45 = vld [vmem:[#allocation5] sm:$0xf]
    %v46 = vxor.u32 %v44, 2147483648
    %v47 = vmul.f32 %v46, 1.442695
    %v48 = vpow.pop %v47
    %v49 = vadd.f32 %v48, 1.0
    %v50 = vrcp.pop %v49
    %v51 = vmul.f32 %v49, %v50
    %v52 = vsub.f32 1.0, %v51
    %v53 = vmul.f32 %v50, %v52
    %v54 = vadd.f32 %v50, %v53
    %vm55 = vweird.f32 %v49
    %vm56 = vweird.f32 %v50
    %vm57 = vmor %vm55, %vm56
    %v58 = vsel %vm57, %v50, %v54
    %v59 = vand.u32 2147483647, %v49
    %vm60 = vcmp.eq.f32.partialorder %v59, 8.507059e+37
    %v61 = vand.u32 %v49, 2147483648
    %v62 = vor.u32 1.1754944e-38, %v61
    %v63 = vsel %vm60, %v62, %v58
    %v64 = vmul.f32 1.0, %v63
    %v65 = vmax.f32 %v64, 0.0001
    %v66 = vmin.f32 %v65, 0.9999
    %v67 = vmul.f32 %v66, %v45
    %v68 = vadd.f32 %v67, 0.0
    %v69 = vlaneseq
    %vm70 = vcmp.ge.s32.totalorder %v69, 0
    %vm71 = vcmp.lt.s32.totalorder %v69, 512
    %vm72 = vmand %vm70, %vm71
    %73 = vst.msk [vmem:[#allocation7] sm:$0xf] %vm72, %v68
    %v74 = vmul.f32 %v66, %v66
    %v75 = vadd.f32 %v74, 0.0
    %76 = vst.msk [vmem:[#allocation8] sm:$0xf] %vm72, %v75
    %v77 = vmul.f32 %v45, %v45
    %v78 = vadd.f32 %v77, 0.0
    %79 = vst.msk [vmem:[#allocation10] sm:$0xf] %vm72, %v78
    // Predicated region
    $region18: #{tpu_custom_call.1} parent=1 // pred_check
      _
    $region19: #{tpu_custom_call.1} parent=1 // pred_check_branch
      %81 = sbr.rel (0) target = $region21
    $region20: #{tpu_custom_call.1} parent=1 // pred_region
      %83 = vsyncadd [#allocation4], 0
      %s85 = sshll.u32 [#allocation7], 4
      %s86 = int_to_ptr.vmem [resolvable:$true] %s85
      %s87 = sshll.u32 %s2, 4
      %s88 = int_to_ptr.hbm [resolvable:$true] %s87
      %90 = dma.vmem_to_hbm [thread:$0]  %s86, 64, %s88, [#allocation4]
    $region21: #{tpu_custom_call.1} parent=1 // pred_fallthru
      _
    // Predicated region
    $region22: #{tpu_custom_call.1} parent=1 // pred_check
      _
    $region23: #{tpu_custom_call.1} parent=1 // pred_check_branch
      %92 = sbr.rel (0) target = $region25
    $region24: #{tpu_custom_call.1} parent=1 // pred_region
      %94 = vsyncadd [#allocation9], 0
      %s96 = sshll.u32 [#allocation8], 4
      %s97 = int_to_ptr.vmem [resolvable:$true] %s96
      %s98 = sshll.u32 %s3, 4
      %s99 = int_to_ptr.hbm [resolvable:$true] %s98
      %101 = dma.vmem_to_hbm [thread:$0]  %s97, 64, %s99, [#allocation9]
    $region25: #{tpu_custom_call.1} parent=1 // pred_fallthru
      _
    // Predicated region
    $region26: #{tpu_custom_call.1} parent=1 // pred_check
      _
    $region27: #{tpu_custom_call.1} parent=1 // pred_check_branch
      %103 = sbr.rel (0) target = $region29
    $region28: #{tpu_custom_call.1} parent=1 // pred_region
      %105 = vsyncadd [#allocation9], 0
      %s107 = sshll.u32 [#allocation10], 4
      %s108 = int_to_ptr.vmem [resolvable:$true] %s107
      %s109 = sshll.u32 %s4, 4
      %s110 = int_to_ptr.hbm [resolvable:$true] %s109
      %112 = dma.vmem_to_hbm [thread:$0]  %s108, 64, %s110, [#allocation9]
    $region29: #{tpu_custom_call.1} parent=1 // pred_fallthru
      _
    // Predicated region
    $region30: #{tpu_custom_call.1} parent=1 // pred_check
      _
    $region31: #{tpu_custom_call.1} parent=1 // pred_check_branch
      %114 = sbr.rel (0) target = $region33
    $region32: #{tpu_custom_call.1} parent=1 // pred_region
      %116 = dma.done [#allocation4], 64
    $region33: #{tpu_custom_call.1} parent=1 // pred_fallthru
      _
    // Predicated region
    $region34: #{tpu_custom_call.1} parent=1 // pred_check
      _
    $region35: #{tpu_custom_call.1} parent=1 // pred_check_branch
      %118 = sbr.rel (0) target = $region37
    $region36: #{tpu_custom_call.1} parent=1 // pred_region
      %120 = dma.done [#allocation9], 64
    $region37: #{tpu_custom_call.1} parent=1 // pred_fallthru
      _
    // Predicated region
    $region38: #{tpu_custom_call.1} parent=1 // pred_check
      _
    $region39: #{tpu_custom_call.1} parent=1 // pred_check_branch
      %122 = sbr.rel (0) target = $region41
    $region40: #{tpu_custom_call.1} parent=1 // pred_region
      %124 = dma.done [#allocation9], 64
    $region41: #{tpu_custom_call.1} parent=1 // pred_fallthru
      _
    %125 = vsyncpa [#allocation3], 1
    %126 = vsyncpa [#allocation6], 1
    %127 = vsyncpa [#allocation4], 1
    %128 = vsyncpa [#allocation9], 1

</llo_original>
